<compile_context>
chip_gen: v7x
topology: tpu7x:2x2x1
jax: 0.10.0
libtpu: 0.0.40
codegen_flags: <defaults>
</compile_context>

<pallas_src>
import functools
import math

import jax
import jax.numpy as jnp
from jax.experimental import pallas as pl
from jax.experimental.pallas import tpu as pltpu

_LANES = 128


# ----------------------------------------------------------------------------------
# Kernel 1: one-hot scatter  (preprocess_input:  input_label.scatter_(1, label_map, 1.0))
# Label/one-hot are presented as lane-dense (B, 1, S) / (B, NC, S) slabs with S = H*W;
# the class dim is chunked so each output block stays well under the VMEM budget.
# ----------------------------------------------------------------------------------
def _one_hot_kernel(label_ref, out_ref, *, tc):
    # label_ref: (1, 1, S) int   out_ref: (1, tc, S)
    c0 = pl.program_id(1) * tc
    lbl = label_ref[0].astype(jnp.int32)                      # (1, S)  (cast is free VPU work)
    s = out_ref.shape[2]
    cls = jax.lax.broadcasted_iota(jnp.int32, (tc, s), 0) + c0
    # implicit broadcast in the compare (no jnp.broadcast_to materialization)
    out_ref[0] = (cls == lbl).astype(out_ref.dtype)


def one_hot_semantics(label, nc, dtype=jnp.float32):
    """label: (B, 1, H, W) int -> (B, NC, H, W) one-hot (dtype, default float32)."""
    B = label.shape[0]
    H, W = label.shape[-2], label.shape[-1]
    S = H * W
    lab = label.reshape(B, 1, S)                              # metadata-only reshape

    itemsize = jnp.dtype(dtype).itemsize
    budget = 4 * 1024 * 1024                                  # per-block output bytes
    if nc * S * itemsize <= budget:
        tc = nc                                               # full class dim in one block
    else:
        tc = max(8, (budget // (S * itemsize)) // 8 * 8)      # multiple of 8
        tc = min(tc, nc)
    nch = pl.cdiv(nc, tc)

    out = pl.pallas_call(
        functools.partial(_one_hot_kernel, tc=tc),
        out_shape=jax.ShapeDtypeStruct((B, nc, S), dtype),
        grid=(B, nch),
        in_specs=[pl.BlockSpec((1, 1, S), lambda b, c: (b, 0, 0))],
        out_specs=pl.BlockSpec((1, tc, S), lambda b, c: (b, c, 0)),
        compiler_params=pltpu.CompilerParams(
            dimension_semantics=("parallel", "parallel"),
            vmem_limit_bytes=32 * 1024 * 1024),
    )(lab)
    return out.reshape(B, nc, H, W)


# ----------------------------------------------------------------------------------
# Kernel 2: get_edges  (4-neighbour label-inequality, OR-reduced)
# Single input stream: neighbours are computed in-kernel with pltpu.roll (XLU) and the
# circular wrap-around is killed with iota boundary masks.
# ----------------------------------------------------------------------------------
def _edges_kernel(t_ref, e_ref):
    t = t_ref[0]                                              # (H, W)
    h, w = t.shape
    row = jax.lax.broadcasted_iota(jnp.int32, (h, w), 0)
    col = jax.lax.broadcasted_iota(jnp.int32, (h, w), 1)
    left = pltpu.roll(t, 1, axis=1)                           # left[i, j]  = t[i, j-1]
    right = pltpu.roll(t, w - 1, axis=1)                      # right[i, j] = t[i, j+1]
    up = pltpu.roll(t, 1, axis=0)                             # up[i, j]    = t[i-1, j]
    down = pltpu.roll(t, h - 1, axis=0)                       # down[i, j]  = t[i+1, j]
    e = (((t != left) & (col > 0))
         | ((t != right) & (col < w - 1))
         | ((t != up) & (row > 0))
         | ((t != down) & (row < h - 1)))
    e_ref[0] = e.astype(e_ref.dtype)


def get_edges(t):
    """t: (B, C, H, W) int -> float edge map, identical to Pix2PixModel.get_edges."""
    B, C, H, W = t.shape
    t2 = t.reshape(B * C, H, W)                               # metadata-only reshape
    out = pl.pallas_call(
        _edges_kernel,
        out_shape=jax.ShapeDtypeStruct((B * C, H, W), jnp.float32),
        grid=(B * C,),
        in_specs=[pl.BlockSpec((1, H, W), lambda i: (i, 0, 0))],
        out_specs=pl.BlockSpec((1, H, W), lambda i: (i, 0, 0)),
        compiler_params=pltpu.CompilerParams(dimension_semantics=("parallel",)),
    )(t2)
    return out.reshape(B, C, H, W)


# ----------------------------------------------------------------------------------
# Kernel 3: fused generator losses
#   weighted L1:  mean(|a - b| * w[batch])      (util.weighted_l1_loss)
#   MSE:          mean((a - b)**2)              (util.mse_loss / MSELoss)
#   L1:           mean(|a - b|)                 (criterionFeat = nn.L1Loss)
# One pass over the two image tensors; per-step partials are accumulated into lane-dense
# (1,128) resident output blocks and only summed to scalars in the wrapper.
# Leading grid axis is "parallel" (one output block per TensorCore on v7x).
# ----------------------------------------------------------------------------------
def _fused_loss_kernel(w_ref, a_ref, b_ref, wl1_ref, mse_ref, l1_ref):
    p = pl.program_id(0)
    i = pl.program_id(1)

    @pl.when(i == 0)
    def _():
        wl1_ref[...] = jnp.zeros_like(wl1_ref)
        mse_ref[...] = jnp.zeros_like(mse_ref)
        l1_ref[...] = jnp.zeros_like(l1_ref)

    d = a_ref[0].astype(jnp.float32) - b_ref[0].astype(jnp.float32)   # (R, 128)
    ad = jnp.abs(d)
    ad_cols = jnp.sum(ad, axis=0, keepdims=True)              # (1, 128) partial sums
    sq_cols = jnp.sum(d * d, axis=0, keepdims=True)           # (1, 128)
    w = w_ref[p * pl.num_programs(1) + i]                     # per-batch scalar from SMEM

    l1_ref[0] += ad_cols
    mse_ref[0] += sq_cols
    wl1_ref[0] += ad_cols * w


def fused_image_losses(pred, target, weights):
    """Returns (weighted_l1_mean, mse_mean, l1_mean) over all elements of pred/target."""
    B = pred.shape[0]
    n = math.prod(pred.shape[1:])
    total = float(B * n)
    R = pl.cdiv(n, _LANES)
    npad = R * _LANES - n

    def prep(x):
        x = x.reshape(B, n)
        if npad:
            x = jnp.pad(x, ((0, 0), (0, npad)))               # zero-pad -> contributes 0
        return x.reshape(B, R, _LANES)                        # lane-dense slab

    a = prep(pred)
    b = prep(target)
    w = jnp.reshape(weights, (B,)).astype(jnp.float32)

    G0 = 2 if (B >= 2 and B % 2 == 0) else 1                  # v7x: split over 2 TensorCores
    G1 = B // G0
    blk = pl.BlockSpec((1, R, _LANES), lambda p, i: (p * G1 + i, 0, 0))
    out_blk = pl.BlockSpec((1, 1, _LANES), lambda p, i: (p, 0, 0))
    out_sh = jax.ShapeDtypeStruct((G0, 1, _LANES), jnp.float32)

    wl1, mse, l1 = pl.pallas_call(
        _fused_loss_kernel,
        out_shape=(out_sh, out_sh, out_sh),
        grid=(G0, G1),
        in_specs=[pl.BlockSpec(memory_space=pltpu.SMEM), blk, blk],
        out_specs=(out_blk, out_blk, out_blk),
        compiler_params=pltpu.CompilerParams(
            dimension_semantics=("parallel", "arbitrary")),
    )(w, a, b)

    inv = 1.0 / total
    return jnp.sum(wl1) * inv, jnp.sum(mse) * inv, jnp.sum(l1) * inv


# ----------------------------------------------------------------------------------
# Kernel 4: reparameterize  (z = eps * exp(0.5*logvar) + mu), lane-dense single block.
# ----------------------------------------------------------------------------------
def _reparam_kernel(mu_ref, logvar_ref, eps_ref, z_ref):
    z_ref[...] = eps_ref[...] * jnp.exp(0.5 * logvar_ref[...]) + mu_ref[...]


def reparameterize(mu, logvar, key):
    shape = mu.shape
    n = math.prod(shape)
    eps = jax.random.normal(key, shape, jnp.float32)
    L = pl.cdiv(n, 8 * _LANES) * 8 * _LANES                   # whole (8,128) vregs

    def prep(x):
        x = x.reshape(n).astype(jnp.float32)
        if L != n:
            x = jnp.pad(x, (0, L - n))
        return x.reshape(L // _LANES, _LANES)

    z = pl.pallas_call(
        _reparam_kernel,
        out_shape=jax.ShapeDtypeStruct((L // _LANES, _LANES), jnp.float32),
    )(prep(mu), prep(logvar), prep(eps))
    return z.reshape(L)[:n].reshape(shape)


# ----------------------------------------------------------------------------------
# The model wrapper (forward-pass pieces that are defined inside Pix2PixModel itself)
# ----------------------------------------------------------------------------------
class Pix2PixModelPallas:
    def __init__(self, label_nc, contain_dontcare_label=False):
        self.nc = label_nc + 1 if contain_dontcare_label else label_nc
        self.alpha = 1
        # TODO(synk): netG / netD / netCorr / netDomainClassifier / VGG19 / GANLoss /
        #             ContextualLoss are external modules (networks.*); not translated.

    # --- Pix2PixModel.preprocess_input (ade20k / coco branch: scatter_ one-hot) ---
    def preprocess_input(self, data):
        input_semantics = one_hot_semantics(data["label"], self.nc)
        ref_semantics = one_hot_semantics(data["label_ref"], self.nc)
        return (data["label"], input_semantics, data["image"], data["self_ref"],
                data["ref"], data["label_ref"], ref_semantics)

    # --- Pix2PixModel.get_edges ---
    def get_edges(self, t):
        return get_edges(t)

    # --- Pix2PixModel.reparameterize ---
    def reparameterize(self, mu, logvar, key):
        return reparameterize(mu, logvar, key)

    # --- Pix2PixModel.discriminate (tensor plumbing only; netD is external) ---
    def discriminate_concat(self, input_semantics, fake_image, real_image):
        fake_concat = jnp.concatenate([input_semantics, fake_image], axis=1)
        real_concat = jnp.concatenate([input_semantics, real_image], axis=1)
        fake_and_real = jnp.concatenate([fake_concat, real_concat], axis=0)
        return fake_and_real

    # --- Pix2PixModel.divide_pred ---
    def divide_pred(self, pred):
        half = pred.shape[0] // 2
        return pred[:half], pred[half:]

    def forward(self, data, mode, alpha=1):
        (input_label, input_semantics, real_image, self_ref,
         ref_image, ref_label, ref_semantics) = self.preprocess_input(dict(data))
        self.alpha = alpha

        if mode == "generator":
            G_losses = {}
            # sample_weights = self_ref[:,0,0,0] / (sum(...) + 1e-5)   (compute_generator_loss)
            sw = self_ref[:, 0, 0, 0] / (jnp.sum(self_ref[:, 0, 0, 0]) + 1e-5)
            # TODO(synk): the real operands are VGG / netG / netCorr outputs (external nets);
            #             the fused loss kernel is exercised on the available image tensors.
            wl1, mse, l1 = fused_image_losses(ref_image, real_image, sw)
            G_losses["G_warp_self"] = wl1
            G_losses["perc"] = mse
            G_losses["GAN_Feat"] = l1
            out = {
                "fake_image": None,        # TODO(synk): requires netG (external)
                "input_semantics": input_semantics,
                "ref_semantics": ref_semantics,
                "warp_out": None,
                "warp_mask": None,
            }
            return G_losses, out

        elif mode == "discriminator":
            # netD itself is external; the concat / split plumbing is reproduced.
            fake_and_real = self.discriminate_concat(input_semantics, ref_image, real_image)
            pred_fake, pred_real = self.divide_pred(fake_and_real)
            return {"D_Fake_input": pred_fake, "D_real_input": pred_real}

        elif mode == "inference":
            out = {
                "fake_image": None,        # TODO(synk): requires netCorr + netG (external)
                "input_semantics": input_semantics,
                "ref_semantics": ref_semantics,
            }
            return out
        else:
            raise ValueError("|mode| is invalid")


# ----------------------------------------------------------------------------------
# Driver
# ----------------------------------------------------------------------------------
if __name__ == "__main__":
    key = jax.random.PRNGKey(0)
    k1, k2, k3, k4, k5, k6 = jax.random.split(key, 6)

    B, H, W = 2, 16, 16
    label_nc = 4
    data = {
        "label": jax.random.randint(k1, (B, 1, H, W), 0, label_nc, dtype=jnp.int32),
        "label_ref": jax.random.randint(k2, (B, 1, H, W), 0, label_nc, dtype=jnp.int32),
        "image": jax.random.normal(k3, (B, 3, H, W), jnp.float32),
        "ref": jax.random.normal(k4, (B, 3, H, W), jnp.float32),
        "self_ref": jnp.ones((B, 3, H, W), jnp.float32),
    }

    model = Pix2PixModelPallas(label_nc=label_nc, contain_dontcare_label=False)

    # generator / inference / discriminator forward branches
    g_losses, g_out = model.forward(data, mode="generator")
    inf_out = model.forward(data, mode="inference")
    d_out = model.forward(data, mode="discriminator")

    # auxiliary forward pieces
    edges = model.get_edges(data["label"])
    mu = jax.random.normal(k5, (B, 32), jnp.float32)
    logvar = jax.random.normal(k6, (B, 32), jnp.float32) * 0.1
    z = model.reparameterize(mu, logvar, jax.random.PRNGKey(1))

    jax.block_until_ready((g_losses, g_out, inf_out, d_out, edges, z))

    # ---- correctness checks against plain-JAX references ----
    sem = g_out["input_semantics"]
    assert sem.shape == (B, label_nc, H, W)
    ref_sem = jax.nn.one_hot(data["label"][:, 0], label_nc, axis=1, dtype=jnp.float32)
    assert jnp.allclose(sem, ref_sem), "one-hot mismatch"

    t = data["label"]
    e_ref = jnp.zeros_like(t, dtype=bool)
    dh = t[:, :, :, 1:] != t[:, :, :, :-1]
    dv = t[:, :, 1:, :] != t[:, :, :-1, :]
    e_ref = e_ref.at[:, :, :, 1:].set(e_ref[:, :, :, 1:] | dh)
    e_ref = e_ref.at[:, :, :, :-1].set(e_ref[:, :, :, :-1] | dh)
    e_ref = e_ref.at[:, :, 1:, :].set(e_ref[:, :, 1:, :] | dv)
    e_ref = e_ref.at[:, :, :-1, :].set(e_ref[:, :, :-1, :] | dv)
    assert jnp.allclose(edges, e_ref.astype(jnp.float32)), "edge mismatch"

    sw = data["self_ref"][:, 0, 0, 0] / (jnp.sum(data["self_ref"][:, 0, 0, 0]) + 1e-5)
    l1_expected = jnp.mean(jnp.abs(data["ref"] - data["image"]) * sw[:, None, None, None])
    mse_expected = jnp.mean((data["ref"] - data["image"]) ** 2)
    plain_l1_expected = jnp.mean(jnp.abs(data["ref"] - data["image"]))
    assert jnp.allclose(g_losses["G_warp_self"], l1_expected, rtol=1e-5, atol=1e-5)
    assert jnp.allclose(g_losses["perc"], mse_expected, rtol=1e-5, atol=1e-5)
    assert jnp.allclose(g_losses["GAN_Feat"], plain_l1_expected, rtol=1e-5, atol=1e-5)

    # reparameterize check
    eps_check = jax.random.normal(jax.random.PRNGKey(1), mu.shape, jnp.float32)
    z_expected = eps_check * jnp.exp(0.5 * logvar) + mu
    assert jnp.allclose(z, z_expected, rtol=1e-5, atol=1e-5), "reparameterize mismatch"

    print("KERNEL_OK")
</pallas_src>

<mosaic_0001>
module attributes {stable_mosaic.version = 11 : i64} {
  func.func @_one_hot_kernel(%arg0: i32, %arg1: i32, %arg2: memref<1x1x256xi32, #tpu.memory_space<vmem>>, %arg3: memref<1x4x256xf32, #tpu.memory_space<vmem>>) attributes {dimension_semantics = [#tpu.dimension_semantics<parallel>, #tpu.dimension_semantics<parallel>], iteration_bounds = array<i64: 2, 1>, scalar_prefetch = 0 : i64, scratch_operands = 0 : i64, tpu.core_type = #tpu.core_type<tc>, window_params = [{transform_indices = @transform_0, window_bounds = array<i64: 1, 1, 256>}, {transform_indices = @transform_1, window_bounds = array<i64: 1, 4, 256>}]} {
    %c4_i32 = arith.constant 4 : i32
    %0 = arith.muli %arg1, %c4_i32 : i32
    %c0 = arith.constant 0 : index
    %c0_0 = arith.constant 0 : index
    %c0_1 = arith.constant 0 : index
    %1 = vector.load %arg2[%c0, %c0_0, %c0_1] : memref<1x1x256xi32, #tpu.memory_space<vmem>>, vector<1x1x256xi32>
    %2 = vector.shape_cast %1 : vector<1x1x256xi32> to vector<1x256xi32>
    %3 = tpu.iota {dimensions = array<i32: 0>} : vector<4x256xi32>
    %4 = vector.broadcast %0 : i32 to vector<4x256xi32>
    %5 = arith.addi %3, %4 : vector<4x256xi32>
    %6 = vector.broadcast %2 : vector<1x256xi32> to vector<4x256xi32>
    %7 = arith.cmpi eq, %5, %6 : vector<4x256xi32>
    %8 = arith.extui %7 : vector<4x256xi1> to vector<4x256xi32>
    %9 = arith.sitofp %8 : vector<4x256xi32> to vector<4x256xf32>
    %c0_2 = arith.constant 0 : index
    %c0_3 = arith.constant 0 : index
    %c0_4 = arith.constant 0 : index
    %10 = vector.load %arg3[%c0_2, %c0_3, %c0_4] : memref<1x4x256xf32, #tpu.memory_space<vmem>>, vector<1x4x256xf32>
    %11 = vector.shape_cast %10 : vector<1x4x256xf32> to vector<4x256xf32>
    %12 = vector.shape_cast %9 : vector<4x256xf32> to vector<1x4x256xf32>
    tpu.vector_store %arg3[%c0_2, %c0_3, %c0_4], %12 {strides = array<i32>} : memref<1x4x256xf32, #tpu.memory_space<vmem>>, vector<1x4x256xf32>,
    return
  }
  func.func @transform_0(%arg0: i32, %arg1: i32) -> (i32, i32, i32) {
    %c0_i32 = arith.constant 0 : i32
    %c0_i32_0 = arith.constant 0 : i32
    %c0_i32_1 = arith.constant 0 : i32
    return %arg0, %c0_i32, %c0_i32_0 : i32, i32, i32
  }
  func.func @transform_1(%arg0: i32, %arg1: i32) -> (i32, i32, i32) {
    %c0_i32 = arith.constant 0 : i32
    %c0_i32_0 = arith.constant 0 : i32
    return %arg0, %arg1, %c0_i32 : i32, i32, i32
  }
}

</mosaic_0001>

<llo_original>
// kernel: tpu_custom_call.1
$region0: #{tpu_custom_call.1}
  #allocation0 [shape = 'u32[]', space=smem, size = 0x4, offset = 0x4, fixed_abs, tag = 'smem constant byte address 0x4 - core index']
  #allocation1 [shape = 'u32[144,128]{1,0:T(1,128)}', space=vmem, size = 0x12000, scoped, tag = 'internal scratch']
  %s0 = inlined_call_operand.hbm [shape: s32[2,1,256], index: 0, kind: input, shape index: {}]
  %s1 = inlined_call_operand.hbm [shape: f32[2,4,256], index: 1, kind: output, shape index: {}]
  %s2 = sld [smem:[#allocation0]]
  $region41: #{tpu_custom_call.1} parent=0
    _
  %s4 = ssub.s32 1, %s2
  %s5 = scalar_select 0, %s4, %s2
  $region1: #{tpu_custom_call.1} parent=0
    #allocation2 [shape = 'u8[2048]{0}', space=vmem, size = 0x800, scoped, tag = 'input window, operand 0']
    #allocation3 [shape = 's32[2]{0}', space=sflag, size = 0x8, scoped, tag = 'scoped memory for tpu_custom_call.1']
    #allocation4 [shape = 's32[2]{0}', space=sflag, size = 0x8, scoped, tag = 'scoped memory for tpu_custom_call.1']
    #allocation5 [shape = 'u8[8192]{0}', space=vmem, size = 0x2000, scoped, tag = 'output window, operand 0']
    %6 = vsyncpa [#allocation3], 0
    %s7 = scalar_lea.sflag [#allocation3], 1
    %8 = vsyncpa %s7, 0
    %9 = vsyncpa [#allocation4], 0
    %s10 = scalar_lea.sflag [#allocation4], 1
    %11 = vsyncpa %s10, 0
    loop: start=0, step=1, limit=4
    $region2: #{tpu_custom_call.1} parent=1 // loop_pre_header
      _
    $region3: #{tpu_custom_call.1} parent=1 // loop_header
      %s13 = sphi 0, %s17
      %p14 = scmp.ge.s32.totalorder %s13, 4
      %s20 = sphi 0, %s32
      %s21 = sphi 0, %s28
      %s22 = sphi 0, %s20
      %s23 = sphi 0, %s21
      %s24 = sphi 0, %s22
      %s25 = sphi 0, %s23
      %s35 = sphi 0, %s37
      %s38 = sphi 0, %s35
      %s39 = sphi 0, %s38
      %s55 = sphi 0, %s39
      %s63 = sphi 0, %s65
      %s66 = sphi 0, %s63
      %s67 = sphi 0, %s66
      %s83 = sphi 0, %s67
    $region4: #{tpu_custom_call.1} parent=1 // loop_header_branch
      %16 = sbr.rel (%p14) target = $region8
    $region5: #{tpu_custom_call.1} parent=1 // loop_body
      %s18 = ssub.s32 %s13, 1
      %s19 = ssub.s32 %s13, 2
      %s26 = sadd.s32 1, %s21
      %p27 = scmp.ge.s32.totalorder %s26, 1
      %s28 = scalar_select %p27, 0, %s26
      %s29 = sadd.s32 1, %s20
      %s30 = scalar_select %p27, %s29, %s20
      %p31 = scmp.ge.s32.totalorder %s30, 2
      %s32 = scalar_select %p31, 0, %s30
      %s33 = ssub.s32 %s20, %s32
      %p34 = scmp.eq.s32.totalorder %s33, 0
      %s36 = sadd.s32 %s35, 1
      %s37 = scalar_select %p34, %s35, %s36
      %p40 = pneg %p34
      %p41 = scmp.eq.s32.totalorder %s13, 1
      %p42 = por %p40, %p41
      %p43 = scmp.ne.s32.totalorder %s35, %s38
      %p44 = scmp.eq.s32.totalorder %s13, 0
      %p45 = por %p43, %p44
      %p46 = scmp.ne.s32.totalorder %s35, %s38
      %p47 = scmp.eq.s32.totalorder %s18, 1
      %p48 = por %p46, %p47
      %p49 = scmp.ne.s32.totalorder %s38, %s39
      %p50 = scmp.eq.s32.totalorder %s18, 0
      %p51 = por %p49, %p50
      %p52 = scmp.ne.s32.totalorder %s38, %s39
      %p53 = scmp.eq.s32.totalorder %s19, 1
      %p54 = por %p52, %p53
      %p56 = scmp.ne.s32.totalorder %s39, %s55
      %p57 = scmp.eq.s32.totalorder %s19, 0
      %p58 = por %p56, %p57
      %s59 = ssub.s32 %s20, %s32
      %s60 = ssub.s32 %s21, %s28
      %s61 = sor.u32 %s59, %s60
      %p62 = scmp.eq.s32.totalorder %s61, 0
      %s64 = sadd.s32 %s63, 1
      %s65 = scalar_select %p62, %s63, %s64
      %p68 = pneg %p62
      %p69 = scmp.eq.s32.totalorder %s13, 1
      %p70 = por %p68, %p69
      %p71 = scmp.ne.s32.totalorder %s63, %s66
      %p72 = scmp.eq.s32.totalorder %s13, 0
      %p73 = por %p71, %p72
      %p74 = scmp.ne.s32.totalorder %s63, %s66
      %p75 = scmp.eq.s32.totalorder %s18, 1
      %p76 = por %p74, %p75
      %p77 = scmp.ne.s32.totalorder %s66, %s67
      %p78 = scmp.eq.s32.totalorder %s18, 0
      %p79 = por %p77, %p78
      %p80 = scmp.ne.s32.totalorder %s66, %s67
      %p81 = scmp.eq.s32.totalorder %s19, 1
      %p82 = por %p80, %p81
      %p84 = scmp.ne.s32.totalorder %s67, %s83
      %p85 = scmp.eq.s32.totalorder %s19, 0
      %p86 = por %p84, %p85
      %p87 = scmp.le.s32.totalorder 1, %s13
      %p88 = scmp.lt.s32.totalorder %s13, 3
      %p89 = pnand %p87, %p88
      %p90 = pneg %p89
      // Predicated region
      $region9: #{tpu_custom_call.1} parent=5 // pred_check
        _
      $region10: #{tpu_custom_call.1} parent=5 // pred_check_branch
        %92 = sbr.rel (%p89) target = $region12
      $region11: #{tpu_custom_call.1} parent=5 // pred_region
        %s93 = ssub.s32 %s13, 1
      $region12: #{tpu_custom_call.1} parent=5 // pred_fallthru
        _
      %p94 = scmp.lt.s32.totalorder %s13, 2
      // Predicated region
      $region13: #{tpu_custom_call.1} parent=5 // pred_check
        %p95 = pneg %p94
      $region14: #{tpu_custom_call.1} parent=5 // pred_check_branch
        %97 = sbr.rel (%p95) target = $region16
      $region15: #{tpu_custom_call.1} parent=5 // pred_region
        // Predicated region
        $region17: #{tpu_custom_call.1} parent=15 // pred_check
          %p98 = pneg %p45
        $region18: #{tpu_custom_call.1} parent=15 // pred_check_branch
          %100 = sbr.rel (%p98) target = $region20
        $region19: #{tpu_custom_call.1} parent=15 // pred_region
          %s101 = sand.u32 %s35, 1
          %s102 = scalar_lea.sflag [#allocation3], %s101
          %s103 = sand.u32 %s35, 1
          %s104 = smul.addr %s103, 2
          %s105 = scalar_lea.vmem [#allocation2], %s104
          %s107 = ssub.s32 32, 32
          %108 = vsyncadd %s102, %s107
          %s109 = smul.addr %s20, 2
          %s110 = smul.addr %s109, 16
          %s111 = scalar_lea.hbm %s0, %s110
          %s113 = sshll.u32 %s105, 4
          %s114 = int_to_ptr.vmem [resolvable:$true] %s113
          %116 = dma.hbm_to_vmem [thread:$0]  %s111, 32, %s114, %s102
        $region20: #{tpu_custom_call.1} parent=15 // pred_fallthru
          _
      $region16: #{tpu_custom_call.1} parent=5 // pred_fallthru
        _
      %p117 = scmp.le.s32.totalorder 1, %s13
      %p118 = scmp.lt.s32.totalorder %s13, 3
      %p119 = pnand %p117, %p118
      %p120 = pneg %p119
      // Predicated region
      $region21: #{tpu_custom_call.1} parent=5 // pred_check
        _
      $region22: #{tpu_custom_call.1} parent=5 // pred_check_branch
        %122 = sbr.rel (%p119) target = $region24
      $region23: #{tpu_custom_call.1} parent=5 // pred_region
        %s123 = ssub.s32 %s13, 1
        %s124 = sand.u32 %s38, 1
        %s125 = scalar_lea.sflag [#allocation3], %s124
        %s126 = sand.u32 %s38, 1
        %s127 = smul.addr %s126, 2
        %s128 = scalar_lea.vmem [#allocation2], %s127
        // Predicated region
        $region25: #{tpu_custom_call.1} parent=23 // pred_check
          %p129 = pneg %p51
        $region26: #{tpu_custom_call.1} parent=23 // pred_check_branch
          %131 = sbr.rel (%p129) target = $region28
        $region27: #{tpu_custom_call.1} parent=23 // pred_region
          %132 = dma.done %s125, 32
        $region28: #{tpu_custom_call.1} parent=23 // pred_fallthru
          _
        %s133 = sand.u32 %s38, 1
        %s134 = scalar_lea.sflag [#allocation3], %s133
        %s135 = sand.u32 %s38, 1
        %s136 = smul.addr %s135, 2
        %s137 = scalar_lea.vmem [#allocation2], %s136
        %p138 = pneg %p51
        %p139 = pneg %p48
        %p140 = pneg %p79
        %p141 = pneg %p76
        %s142 = sand.u32 %s66, 1
        %s143 = scalar_lea.sflag [#allocation4], %s142
        %s144 = sand.u32 %s66, 1
        %s145 = smul.addr %s144, 8
        %s146 = scalar_lea.vmem [#allocation5], %s145
        %s147 = smul.u32 %s23, 4
        %v148 = vld [vmem:[%s128] sm:$0x3]
        %v149 = vlaneseq
        %v150 = vshrl.u32 %v149, 7
        %v151 = vstv %s147
        %v152 = vadd.s32 %v150, %v151
        %v153 = vlaneseq
        %v154 = vshrl.u32 %v153, 7
        %v155 = vsub.s32 0, %v154
        %v156 = vrot.slane %v148, %v155
        %v157 = vlaneseq
        %v158 = vshrl.u32 %v157, 7
        %v159 = vsub.s32 1, %v158
        %v160 = vrot.slane %v148, %v159
        %vm161 = vcmp.eq.s32.totalorder %v152, %v156
        %vm162 = vcmp.eq.s32.totalorder %v152, %v160
        %v163 = vsel %vm161, 1, 0
        %v164 = vsel %vm162, 1, 0
        %v165 = vcvt.s32.f32 %v163
        %v166 = vcvt.s32.f32 %v164
        %v169 = vcombine.low %v165, %v166
        %171 = vst [vmem:[%s146] sm:$0xff] %v169
        %s172 = sand.u32 %s66, 1
        %s173 = scalar_lea.sflag [#allocation4], %s172
        %s174 = sand.u32 %s66, 1
        %s175 = smul.addr %s174, 8
        %s176 = scalar_lea.vmem [#allocation5], %s175
        // Predicated region
        $region29: #{tpu_custom_call.1} parent=23 // pred_check
          %p177 = pneg %p76
        $region30: #{tpu_custom_call.1} parent=23 // pred_check_branch
          %179 = sbr.rel (%p177) target = $region32
        $region31: #{tpu_custom_call.1} parent=23 // pred_region
          %s181 = ssub.s32 128, 128
          %182 = vsyncadd %s173, %s181
          %s183 = smul.addr %s23, 2
          %s184 = smul.addr %s22, 2
          %s185 = sadd.s32 %s183, %s184
          %s186 = smul.addr %s185, 64
          %s187 = scalar_lea.hbm %s1, %s186
          %s189 = sshll.u32 %s176, 4
          %s190 = int_to_ptr.vmem [resolvable:$true] %s189
          %192 = dma.vmem_to_hbm [thread:$0]  %s190, 128, %s187, %s173
        $region32: #{tpu_custom_call.1} parent=23 // pred_fallthru
          _
      $region24: #{tpu_custom_call.1} parent=5 // pred_fallthru
        _
      %p193 = scmp.le.s32.totalorder 2, %s13
      // Predicated region
      $region33: #{tpu_custom_call.1} parent=5 // pred_check
        %p194 = pneg %p193
      $region34: #{tpu_custom_call.1} parent=5 // pred_check_branch
        %196 = sbr.rel (%p194) target = $region36
      $region35: #{tpu_custom_call.1} parent=5 // pred_region
        %s197 = ssub.s32 %s13, 2
        // Predicated region
        $region37: #{tpu_custom_call.1} parent=35 // pred_check
          %p198 = pneg %p82
        $region38: #{tpu_custom_call.1} parent=35 // pred_check_branch
          %200 = sbr.rel (%p198) target = $region40
        $region39: #{tpu_custom_call.1} parent=35 // pred_region
          %s201 = sand.u32 %s67, 1
          %s202 = scalar_lea.sflag [#allocation4], %s201
          %s203 = sand.u32 %s67, 1
          %s204 = smul.addr %s203, 8
          %s205 = scalar_lea.vmem [#allocation5], %s204
          %206 = dma.done %s202, 128
        $region40: #{tpu_custom_call.1} parent=35 // pred_fallthru
          _
      $region36: #{tpu_custom_call.1} parent=5 // pred_fallthru
        _
    $region6: #{tpu_custom_call.1} parent=1 // loop_footer
      %s17 = sadd.s32 1, %s13
    $region7: #{tpu_custom_call.1} parent=1 // loop_footer_branch
      %12 = sbr.rel target = $region3
    $region8: #{tpu_custom_call.1} parent=1 // loop_exit
      _
    %207 = vsyncpa [#allocation3], 1
    %s208 = scalar_lea.sflag [#allocation3], 1
    %209 = vsyncpa %s208, 1
    %210 = vsyncpa [#allocation4], 1
    %s211 = scalar_lea.sflag [#allocation4], 1
    %212 = vsyncpa %s211, 1

</llo_original>
